<compile_context>
chip_gen: v6e
topology: v6e:2x2x1
jax: 0.10.0
libtpu: 0.0.40
codegen_flags: <defaults>
</compile_context>

<pallas_src>
import functools

import jax
import jax.numpy as jnp
from jax.experimental import pallas as pl
from jax.experimental.pallas import tpu as pltpu


def _round_up(a, b):
    return (a + b - 1) // b * b


def _concat_pool_kernel(x_ref, out_ref, max_acc, sum_acc, *,
                        hw, tile_cols, inv_hw, need_col_mask):
    """Grid = (row_tiles [parallel], col_tiles [arbitrary / reduction over H*W])."""
    k = pl.program_id(1)

    @pl.when(k == 0)
    def _init():
        max_acc[...] = jnp.full(max_acc.shape, -jnp.inf, dtype=max_acc.dtype)
        sum_acc[...] = jnp.zeros(sum_acc.shape, dtype=sum_acc.dtype)

    x = x_ref[...]  # (tile_rows, tile_cols), native dtype

    if need_col_mask:
        # Last spatial block extends past the true H*W extent: mask padded lanes
        # (-inf for max, 0 for sum) so garbage never corrupts the result.
        col = k * tile_cols + jax.lax.broadcasted_iota(jnp.int32, x.shape, 1)
        valid = col < hw
        if jnp.issubdtype(x.dtype, jnp.floating):
            neg_fill = jnp.array(-jnp.inf, dtype=x.dtype)
        else:
            neg_fill = jnp.array(jnp.iinfo(x.dtype).min, dtype=x.dtype)
        x_max = jnp.where(valid, x, neg_fill)
        x_sum = jnp.where(valid, x, jnp.zeros((), dtype=x.dtype))
    else:
        x_max = x
        x_sum = x

    # Max is exact in the native dtype (no upcast of the whole tile needed);
    # the sum is accumulated in f32.
    part_max = jnp.max(x_max, axis=-1, keepdims=True).astype(jnp.float32)
    part_sum = jnp.sum(x_sum.astype(jnp.float32), axis=-1, keepdims=True)

    max_acc[...] = jnp.maximum(max_acc[...], part_max)
    sum_acc[...] = sum_acc[...] + part_sum

    @pl.when(k == pl.num_programs(1) - 1)
    def _finalize():
        avg = sum_acc[...] * inv_hw                          # sum * (1/HW): one VPU mul
        res = jnp.concatenate([max_acc[...], avg], axis=1)   # (tile_rows, 2)
        out_ref[...] = res.astype(out_ref.dtype)


def adaptive_concat_pool2d(x):
    """x: (N, C, H, W) NCHW. Returns (N, 2*C, 1, 1): [global max pool, global avg pool]."""
    N, C, H, W = x.shape
    NC, HW = N * C, H * W
    x2 = x.reshape(NC, HW)

    itemsize = jnp.dtype(x.dtype).itemsize

    # ---- spatial (reduction) tiling ----
    MAX_COLS = 8192                                  # lanes per block, multiple of 128
    tile_cols = HW if HW <= MAX_COLS else MAX_COLS
    n_col_tiles = pl.cdiv(HW, tile_cols)
    need_col_mask = (HW % tile_cols) != 0

    # ---- row (N*C) tiling: ~4 MiB input blocks (lane-padding aware), so 2x-buffered
    # blocks fit comfortably inside every generation's scoped VMEM budget ----
    TARGET_BLOCK_BYTES = 4 * 1024 * 1024
    cols_padded = _round_up(tile_cols, 128)
    rows_for_target = max(128, TARGET_BLOCK_BYTES // (cols_padded * itemsize))
    if NC <= 256 or rows_for_target >= NC:
        tile_rows = NC                               # full extent: always layout-legal
    else:
        tile_rows = min((rows_for_target // 128) * 128, 8192)   # multiple of 128
    n_row_tiles = pl.cdiv(NC, tile_rows)

    kernel = functools.partial(
        _concat_pool_kernel,
        hw=HW,
        tile_cols=tile_cols,
        inv_hw=float(1.0 / HW),
        need_col_mask=need_col_mask,
    )

    out2 = pl.pallas_call(
        kernel,
        out_shape=jax.ShapeDtypeStruct((NC, 2), x.dtype),
        grid=(n_row_tiles, n_col_tiles),
        in_specs=[pl.BlockSpec((tile_rows, tile_cols), lambda i, k: (i, k))],
        out_specs=pl.BlockSpec((tile_rows, 2), lambda i, k: (i, 0)),
        scratch_shapes=[
            pltpu.VMEM((tile_rows, 1), jnp.float32),   # running max
            pltpu.VMEM((tile_rows, 1), jnp.float32),   # running sum
        ],
        compiler_params=pltpu.CompilerParams(
            dimension_semantics=("parallel", "arbitrary"),
            vmem_limit_bytes=32 * 1024 * 1024,
        ),
        cost_estimate=pl.CostEstimate(
            flops=2 * NC * HW,
            transcendentals=0,
            bytes_accessed=NC * HW * itemsize + NC * 2 * itemsize,
        ),
    )(x2)

    # (NC, 2) -> (N, C, 2) -> (N, 2, C) -> (N, 2C, 1, 1):
    # max channels first, then avg channels, matching torch.cat([mp(x), ap(x)], dim=1).
    return jnp.transpose(out2.reshape(N, C, 2), (0, 2, 1)).reshape(N, 2 * C, 1, 1)


def _reference(x):
    return jnp.concatenate(
        [
            jnp.max(x, axis=(2, 3), keepdims=True),
            jnp.mean(x, axis=(2, 3), keepdims=True),
        ],
        axis=1,
    )


if __name__ == "__main__":
    key = jax.random.PRNGKey(0)
    k1, k2 = jax.random.split(key)

    # Small canonical case (single-block path).
    x = jax.random.normal(k1, (2, 4, 16, 16), dtype=jnp.float32)
    out = jax.block_until_ready(adaptive_concat_pool2d(x))
    assert out.shape == (2, 8, 1, 1), out.shape
    assert jnp.allclose(out, _reference(x), atol=1e-5, rtol=1e-5)

    # Small case exercising the tiled spatial reduction + tail masking path (HW > 8192).
    x_big_hw = jax.random.normal(k2, (1, 2, 96, 96), dtype=jnp.float32)
    out_big = jax.block_until_ready(adaptive_concat_pool2d(x_big_hw))
    assert out_big.shape == (1, 4, 1, 1), out_big.shape
    assert jnp.allclose(out_big, _reference(x_big_hw), atol=1e-5, rtol=1e-5)

    print("KERNEL_OK")
</pallas_src>

<mosaic_0001>
module attributes {stable_mosaic.version = 11 : i64} {
  func.func @_concat_pool_kernel(%arg0: i32, %arg1: i32, %arg2: memref<8x256xf32, #tpu.memory_space<vmem>>, %arg3: memref<8x2xf32, #tpu.memory_space<vmem>>, %arg4: memref<8x1xf32, #tpu.memory_space<vmem>>, %arg5: memref<8x1xf32, #tpu.memory_space<vmem>>) attributes {dimension_semantics = [#tpu.dimension_semantics<parallel>, #tpu.dimension_semantics<arbitrary>], iteration_bounds = array<i64: 1, 1>, scalar_prefetch = 0 : i64, scratch_operands = 2 : i64, tpu.core_type = #tpu.core_type<tc>, window_params = [{transform_indices = @transform_0, window_bounds = array<i64: 8, 256>}, {transform_indices = @transform_1, window_bounds = array<i64: 8, 2>}]} {
    %c0_i32 = arith.constant 0 : i32
    %0 = arith.cmpi eq, %arg1, %c0_i32 : i32
    %1 = arith.extui %0 : i1 to i32
    %c0_i32_0 = arith.constant 0 : i32
    %2 = arith.cmpi ne, %1, %c0_i32_0 : i32
    scf.if %2 {
      %cst_13 = arith.constant 0xFF800000 : f32
      %17 = vector.broadcast %cst_13 : f32 to vector<8x1xf32>
      %c0_14 = arith.constant 0 : index
      %c0_15 = arith.constant 0 : index
      %18 = vector.load %arg4[%c0_14, %c0_15] : memref<8x1xf32, #tpu.memory_space<vmem>>, vector<8x1xf32>
      tpu.vector_store %arg4[%c0_14, %c0_15], %17 {strides = array<i32>} : memref<8x1xf32, #tpu.memory_space<vmem>>, vector<8x1xf32>,
      %cst_16 = arith.constant 0.000000e+00 : f32
      %19 = vector.broadcast %cst_16 : f32 to vector<8x1xf32>
      %c0_17 = arith.constant 0 : index
      %c0_18 = arith.constant 0 : index
      %20 = vector.load %arg5[%c0_17, %c0_18] : memref<8x1xf32, #tpu.memory_space<vmem>>, vector<8x1xf32>
      tpu.vector_store %arg5[%c0_17, %c0_18], %19 {strides = array<i32>} : memref<8x1xf32, #tpu.memory_space<vmem>>, vector<8x1xf32>,
    } else {
    }
    %c0 = arith.constant 0 : index
    %c0_1 = arith.constant 0 : index
    %3 = vector.load %arg2[%c0, %c0_1] : memref<8x256xf32, #tpu.memory_space<vmem>>, vector<8x256xf32>
    %cst = arith.constant dense<0xFF800000> : vector<8xf32>
    %4 = vector.multi_reduction <maximumf>, %3, %cst [1] : vector<8x256xf32> to vector<8xf32>
    %5 = vector.shape_cast %4 : vector<8xf32> to vector<8x1xf32>
    %cst_2 = arith.constant dense<0.000000e+00> : vector<8xf32>
    %6 = vector.multi_reduction <add>, %3, %cst_2 [1] : vector<8x256xf32> to vector<8xf32>
    %7 = vector.shape_cast %6 : vector<8xf32> to vector<8x1xf32>
    %c0_3 = arith.constant 0 : index
    %c0_4 = arith.constant 0 : index
    %8 = vector.load %arg4[%c0_3, %c0_4] : memref<8x1xf32, #tpu.memory_space<vmem>>, vector<8x1xf32>
    %9 = arith.maximumf %8, %5 : vector<8x1xf32>
    %c0_5 = arith.constant 0 : index
    %c0_6 = arith.constant 0 : index
    %10 = vector.load %arg4[%c0_5, %c0_6] : memref<8x1xf32, #tpu.memory_space<vmem>>, vector<8x1xf32>
    tpu.vector_store %arg4[%c0_5, %c0_6], %9 {strides = array<i32>} : memref<8x1xf32, #tpu.memory_space<vmem>>, vector<8x1xf32>,
    %c0_7 = arith.constant 0 : index
    %c0_8 = arith.constant 0 : index
    %11 = vector.load %arg5[%c0_7, %c0_8] : memref<8x1xf32, #tpu.memory_space<vmem>>, vector<8x1xf32>
    %12 = arith.addf %11, %7 : vector<8x1xf32>
    %c0_9 = arith.constant 0 : index
    %c0_10 = arith.constant 0 : index
    %13 = vector.load %arg5[%c0_9, %c0_10] : memref<8x1xf32, #tpu.memory_space<vmem>>, vector<8x1xf32>
    tpu.vector_store %arg5[%c0_9, %c0_10], %12 {strides = array<i32>} : memref<8x1xf32, #tpu.memory_space<vmem>>, vector<8x1xf32>,
    %c0_i32_11 = arith.constant 0 : i32
    %14 = arith.cmpi eq, %arg1, %c0_i32_11 : i32
    %15 = arith.extui %14 : i1 to i32
    %c0_i32_12 = arith.constant 0 : i32
    %16 = arith.cmpi ne, %15, %c0_i32_12 : i32
    scf.if %16 {
      %c0_13 = arith.constant 0 : index
      %c0_14 = arith.constant 0 : index
      %17 = vector.load %arg5[%c0_13, %c0_14] : memref<8x1xf32, #tpu.memory_space<vmem>>, vector<8x1xf32>
      %cst_15 = arith.constant 3.906250e-03 : f32
      %18 = vector.broadcast %cst_15 : f32 to vector<8x1xf32>
      %19 = arith.mulf %17, %18 : vector<8x1xf32>
      %c0_16 = arith.constant 0 : index
      %c0_17 = arith.constant 0 : index
      %20 = vector.load %arg4[%c0_16, %c0_17] : memref<8x1xf32, #tpu.memory_space<vmem>>, vector<8x1xf32>
      %21 = tpu.concatenate %20, %19 in 1 : vector<8x1xf32>, vector<8x1xf32> -> vector<8x2xf32>
      %c0_18 = arith.constant 0 : index
      %c0_19 = arith.constant 0 : index
      %22 = vector.load %arg3[%c0_18, %c0_19] : memref<8x2xf32, #tpu.memory_space<vmem>>, vector<8x2xf32>
      tpu.vector_store %arg3[%c0_18, %c0_19], %21 {strides = array<i32>} : memref<8x2xf32, #tpu.memory_space<vmem>>, vector<8x2xf32>,
    } else {
    }
    return
  }
  func.func @transform_0(%arg0: i32, %arg1: i32) -> (i32, i32) {
    %c0_i32 = arith.constant 0 : i32
    return %arg0, %arg1 : i32, i32
  }
  func.func @transform_1(%arg0: i32, %arg1: i32) -> (i32, i32) {
    %c0_i32 = arith.constant 0 : i32
    %c0_i32_0 = arith.constant 0 : i32
    return %arg0, %c0_i32 : i32, i32
  }
}

</mosaic_0001>

<llo_original>
// kernel: tpu_custom_call.1
$region0: #{tpu_custom_call.1}
  #allocation0 [shape = 'u32[]', space=smem, size = 0x4, offset = 0x4, fixed_abs, tag = 'smem constant byte address 0x4 - core index']
  #allocation1 [shape = 'u32[144,128]{1,0:T(1,128)}', space=vmem, size = 0x12000, scoped, tag = 'internal scratch']
  #allocation2 [shape = 'f32[8,1]{1,0:T(8,128)}', space=vmem, size = 0x1000, scoped, tag = 'scratch operand']
  #allocation3 [shape = 'f32[8,1]{1,0:T(8,128)}', space=vmem, size = 0x1000, scoped, tag = 'scratch operand']
  %s0 = inlined_call_operand.hbm [shape: f32[8,256], index: 0, kind: input, shape index: {}]
  %s1 = inlined_call_operand.vmem [shape: f32[8,2], index: 1, kind: output, shape index: {}]
  %s2 = sld [smem:[#allocation0]]
  $region26: #{tpu_custom_call.1} parent=0
    _
  %s4 = ssub.s32 1, %s2
  %s5 = scalar_select 0, %s4, %s2
  $region1: #{tpu_custom_call.1} parent=0
    #allocation4 [shape = 'u8[8192]{0}', space=vmem, size = 0x2000, scoped, tag = 'input window, operand 0, single buffered']
    #allocation5 [shape = 's32[1]{0}', space=sflag, size = 0x4, scoped, tag = 'scoped memory for tpu_custom_call.1']
    %6 = vsyncpa [#allocation5], 0
    // Predicated region
    $region2: #{tpu_custom_call.1} parent=1 // pred_check
      _
    $region3: #{tpu_custom_call.1} parent=1 // pred_check_branch
      %8 = sbr.rel (0) target = $region5
    $region4: #{tpu_custom_call.1} parent=1 // pred_region
      %s10 = ssub.s32 256, 256
      %11 = vsyncadd [#allocation5], %s10
      %s13 = sshll.u32 [#allocation4], 4
      %s14 = int_to_ptr.vmem [resolvable:$true] %s13
      %16 = dma.hbm_to_vmem [thread:$0]  %s0, 256, %s14, [#allocation5]
    $region5: #{tpu_custom_call.1} parent=1 // pred_fallthru
      _
    // Predicated region
    $region6: #{tpu_custom_call.1} parent=1 // pred_check
      _
    $region7: #{tpu_custom_call.1} parent=1 // pred_check_branch
      %18 = sbr.rel (0) target = $region9
    $region8: #{tpu_custom_call.1} parent=1 // pred_region
      %19 = dma.done [#allocation5], 256
    $region9: #{tpu_custom_call.1} parent=1 // pred_fallthru
      _
    %p20 = scmp.eq.s32.totalorder 0, 0
    // Predicated region
    $region10: #{tpu_custom_call.1} parent=1 // pred_check
      %p21 = pneg %p20
    $region11: #{tpu_custom_call.1} parent=1 // pred_check_branch
      %23 = sbr.rel (%p21) target = $region13
    $region12: #{tpu_custom_call.1} parent=1 // pred_region
      %vm24 = vcmask 7168
      %25 = vst.msk [vmem:[#allocation2] sm:$0xff] %vm24, -inf
      %26 = vst.msk [vmem:[#allocation3] sm:$0xff] %vm24, 0.0
    $region13: #{tpu_custom_call.1} parent=1 // pred_fallthru
      _
    %v27 = vld [vmem:[#allocation4] sm:$0xff]
    %v28 = vld [vmem:[#allocation4 + $0x8] sm:$0xff]
    %v29 = vmax.f32 %v27, %v28
    %30 = vmax.xlane.f32.xlu0 %v29
    %v31 = vpop.xlane.xlu0 %30
    %v32 = vadd.f32 %v27, %v28
    %33 = vadd.xlane.f32.xlu0 %v32
    %v34 = vpop.xlane.xlu0 %33
    %v35 = vld [vmem:[#allocation2] sm:$0xff]
    %v36 = vmax.f32 %v35, %v31
    %vm37 = vcmask 7168
    %38 = vst.msk [vmem:[#allocation2] sm:$0xff] %vm37, %v36
    %v39 = vld [vmem:[#allocation3] sm:$0xff]
    %v40 = vadd.f32 %v39, %v34
    %41 = vst.msk [vmem:[#allocation3] sm:$0xff] %vm37, %v40
    // Predicated region
    $region14: #{tpu_custom_call.1} parent=1 // pred_check
      %p42 = pneg %p20
    $region15: #{tpu_custom_call.1} parent=1 // pred_check_branch
      %44 = sbr.rel (%p42) target = $region17
    $region16: #{tpu_custom_call.1} parent=1 // pred_region
      %v45 = vld [vmem:[#allocation3] sm:$0xff]
      %v46 = vmul.f32 %v45, 0.00390625
      %v47 = vld [vmem:[#allocation2] sm:$0xff]
      %49 = vrot.lane.b32.xlu0 %v46, 1
      %v50 = vpop.permute.xlu0 %49
      %v52 = vsel %vm37, %v47, %v50
      %vm53 = vcmask 15360
      %54 = vst.msk [vmem:[%s1] sm:$0xff] %vm53, %v52
    $region17: #{tpu_custom_call.1} parent=1 // pred_fallthru
      _
    // Predicated region
    $region18: #{tpu_custom_call.1} parent=1 // pred_check
      _
    $region19: #{tpu_custom_call.1} parent=1 // pred_check_branch
      %56 = sbr.rel (0) target = $region21
    $region20: #{tpu_custom_call.1} parent=1 // pred_region
      _
    $region21: #{tpu_custom_call.1} parent=1 // pred_fallthru
      _
    // Predicated region
    $region22: #{tpu_custom_call.1} parent=1 // pred_check
      _
    $region23: #{tpu_custom_call.1} parent=1 // pred_check_branch
      %58 = sbr.rel (0) target = $region25
    $region24: #{tpu_custom_call.1} parent=1 // pred_region
      _
    $region25: #{tpu_custom_call.1} parent=1 // pred_fallthru
      _
    %59 = vsyncpa [#allocation5], 1

</llo_original>
